<compile_context>
chip_gen: v6e
topology: v6e:2x2x1
jax: 0.10.0
libtpu: 0.0.40
codegen_flags: <defaults>
</compile_context>

<pallas_src>
import functools

import jax
import jax.numpy as jnp
from jax.experimental import pallas as pl
from jax.experimental.pallas import tpu as pltpu

_TB_TARGET = 8      # batch tile   (sublane quantum for the mask / output blocks)
_TS_TARGET = 256    # sequence tile (multiple of 128: mask lane dim, x sublane dim)
_TH_TARGET = 512    # hidden tile  (lane-dense output stores)


def _round_up(v: int, m: int) -> int:
    return (v + m - 1) // m * m


def _pick_tile(dim: int, target: int):
    """Full-dim block if small, else `target` with the dim padded to a multiple."""
    if dim <= target:
        return dim, dim
    return target, _round_up(dim, target)


# --------------------------------------------------------------------------
# mean / sum / max : tiled reduction over S with a resident f32 accumulator
# --------------------------------------------------------------------------
def _make_reduce_kernel(mode: str):
    assert mode in ("mean", "sum", "max")

    def kernel(x_ref, m_ref, o_ref, acc_ref, len_ref):
        s = pl.program_id(2)

        @pl.when(s == 0)
        def _init():
            if mode == "max":
                acc_ref[...] = jnp.full_like(acc_ref, -jnp.inf)
            else:
                acc_ref[...] = jnp.zeros_like(acc_ref)
            len_ref[...] = jnp.zeros_like(len_ref)

        x = x_ref[...].astype(jnp.float32)      # (TB, TS, TH)
        m = m_ref[...].astype(jnp.float32)      # (TB, TS)

        if mode == "max":
            # torch: x[mask == 0] = -1e6 ; max over S
            xm = jnp.where(m[:, :, None] == 0.0, jnp.float32(-1000000.0), x)
            acc_ref[...] = jnp.maximum(acc_ref[...], jnp.max(xm, axis=1))
        else:
            # masked sum over this S tile (VPU mul + XLU reduce; kernel is
            # HBM-bandwidth-bound so these slots have plenty of slack)
            acc_ref[...] += jnp.sum(x * m[:, :, None], axis=1)
            if mode == "mean":
                len_ref[...] += jnp.sum(m, axis=1, keepdims=True)

        @pl.when(s == pl.num_programs(2) - 1)
        def _finalize():
            acc = acc_ref[...]
            if mode == "mean":
                # EUP approx reciprocal instead of a VPU divide (runs once per tile)
                acc = acc * pl.reciprocal(len_ref[...], approx=True)
            o_ref[...] = acc.astype(o_ref.dtype)

    return kernel


# --------------------------------------------------------------------------
# cls : copy of x[:, 0, :] — only S block 0 is ever DMA'd
# --------------------------------------------------------------------------
def _cls_kernel(x_ref, o_ref):
    o_ref[...] = x_ref[:, 0, :]


# --------------------------------------------------------------------------
# sep : per-batch single-row gather via manual HBM->VMEM DMAs
# --------------------------------------------------------------------------
def _make_sep_kernel(batch: int):
    def kernel(rows_ref, x_ref, o_ref, buf_ref, sem):
        # rows_ref : (B,) int32 in SMEM, flat row index b*S + sep_idx[b]
        # x_ref    : (B*S, H) in HBM (memory_space=ANY), no automatic DMA
        @pl.loop(0, batch)
        def _start(b):
            pltpu.make_async_copy(
                x_ref.at[rows_ref[b]], buf_ref.at[b], sem.at[b]).start()

        @pl.loop(0, batch)
        def _wait(b):
            pltpu.make_async_copy(
                x_ref.at[rows_ref[b]], buf_ref.at[b], sem.at[b]).wait()

        o_ref[...] = buf_ref[...]

    return kernel


# --------------------------------------------------------------------------
# wrapper
# --------------------------------------------------------------------------
@functools.partial(jax.jit, static_argnames=("pooling_name",))
def pooling(x: jax.Array, attention_mask: jax.Array, pooling_name: str) -> jax.Array:
    """Pallas-backed equivalent of Pooling(pooling_name)(x, attention_mask)."""
    B, S, H = x.shape

    if pooling_name == "cls":
        ts = S if S < 8 else 8          # only the first <=8 rows leave HBM
        return pl.pallas_call(
            _cls_kernel,
            out_shape=jax.ShapeDtypeStruct((B, H), x.dtype),
            grid=(1,),
            in_specs=[pl.BlockSpec((B, ts, H), lambda i: (0, 0, 0))],
            out_specs=pl.BlockSpec((B, H), lambda i: (0, 0)),
            compiler_params=pltpu.CompilerParams(
                dimension_semantics=("arbitrary",)),
        )(x)

    if pooling_name == "sep":
        sent_len = jnp.sum(attention_mask.astype(jnp.int32), axis=1)
        sep_idx = sent_len - 1
        # torch gathers x[b, -1] for an all-zero mask row (negative indexing).
        sep_idx = jnp.where(sep_idx < 0, S - 1, sep_idx)
        rows = (jnp.arange(B, dtype=jnp.int32) * S + sep_idx).astype(jnp.int32)
        x_flat = x.reshape(B * S, H)            # row-major reshape: no copy
        return pl.pallas_call(
            _make_sep_kernel(B),
            out_shape=jax.ShapeDtypeStruct((B, H), x.dtype),
            grid=(1,),
            in_specs=[
                pl.BlockSpec(memory_space=pltpu.MemorySpace.SMEM),  # rows
                pl.BlockSpec(memory_space=pl.ANY),                  # x_flat (HBM)
            ],
            out_specs=pl.BlockSpec((B, H), lambda i: (0, 0)),
            scratch_shapes=[pltpu.VMEM((B, H), x.dtype),
                            pltpu.SemaphoreType.DMA((B,))],
            compiler_params=pltpu.CompilerParams(
                dimension_semantics=("arbitrary",)),
        )(rows, x_flat)

    if pooling_name not in ("mean", "sum", "max"):
        raise ValueError(f"No such a pooling name! {pooling_name}")

    tb, bp = _pick_tile(B, _TB_TARGET)
    ts, sp = _pick_tile(S, _TS_TARGET)
    th, hp = _pick_tile(H, _TH_TARGET)

    xp, mp = x, attention_mask
    if (bp, sp, hp) != (B, S, H):
        # Padding only triggers for ragged shapes; padded positions have mask=0
        # (mean/sum ignore them, max sees the same -1e6 fill as torch).
        xp = jnp.pad(x, ((0, bp - B), (0, sp - S), (0, hp - H)))
        mp = jnp.pad(attention_mask, ((0, bp - B), (0, sp - S)))

    out = pl.pallas_call(
        _make_reduce_kernel(pooling_name),
        out_shape=jax.ShapeDtypeStruct((bp, hp), x.dtype),
        grid=(bp // tb, hp // th, sp // ts),
        in_specs=[
            pl.BlockSpec((tb, ts, th), lambda b, h, s: (b, s, h)),
            pl.BlockSpec((tb, ts), lambda b, h, s: (b, s)),
        ],
        out_specs=pl.BlockSpec((tb, th), lambda b, h, s: (b, h)),
        scratch_shapes=[pltpu.VMEM((tb, th), jnp.float32),   # accumulator
                        pltpu.VMEM((tb, 1), jnp.float32)],   # sent_len (mean)
        compiler_params=pltpu.CompilerParams(
            dimension_semantics=("parallel", "parallel", "arbitrary")),
    )(xp, mp)

    if (bp, hp) != (B, H):
        out = out[:B, :H]
    return out


# --------------------------------------------------------------------------
# pure-JAX reference (mirrors the PyTorch semantics) + self-test
# --------------------------------------------------------------------------
def _pooling_ref(x, attention_mask, pooling_name):
    x = x.astype(jnp.float32)
    m = attention_mask.astype(jnp.float32)
    if pooling_name == "cls":
        return x[:, 0]
    if pooling_name == "sep":
        sent_len = m.sum(axis=1)
        sep_idx = (sent_len - 1).astype(jnp.int32)
        sep_idx = jnp.where(sep_idx < 0, x.shape[1] - 1, sep_idx)
        return x[jnp.arange(x.shape[0]), sep_idx]
    if pooling_name in ("mean", "sum"):
        s = (x * m[:, :, None]).sum(axis=1)
        if pooling_name == "mean":
            return s / m.sum(axis=1, keepdims=True)
        return s
    if pooling_name == "max":
        xm = jnp.where(m[:, :, None] == 0.0, jnp.float32(-1000000.0), x)
        return xm.max(axis=1)
    raise ValueError(pooling_name)


def _check(x, mask, name, atol, rtol):
    out = jax.block_until_ready(pooling(x, mask, name))
    ref = _pooling_ref(x, mask, name)
    assert out.shape == ref.shape, (name, out.shape, ref.shape)
    assert jnp.allclose(out.astype(jnp.float32), ref, atol=atol, rtol=rtol), name


if __name__ == "__main__":
    key = jax.random.PRNGKey(0)
    k1, k2, k3, k4 = jax.random.split(key, 4)

    # Small deterministic example: batch=2, seq=8, hidden=32 (single-block path).
    B, S, H = 2, 8, 32
    x = jax.random.normal(k1, (B, S, H), dtype=jnp.float32)
    lengths = jnp.array([8, 5], dtype=jnp.int32)
    mask = (jnp.arange(S, dtype=jnp.int32)[None, :] < lengths[:, None]).astype(jnp.float32)

    for name in ["cls", "sep", "mean", "max", "sum"]:
        tol = 2e-3 if name == "mean" else 1e-5   # mean uses EUP approx reciprocal
        _check(x, mask, name, atol=tol, rtol=tol)

    # Larger ragged example to exercise the tiled accumulator path
    # (B padded 10->16, S padded 384->512 with 2 S-steps, H=160 full block).
    B2, S2, H2 = 10, 384, 160
    x2 = jax.random.normal(k2, (B2, S2, H2), dtype=jnp.float32)
    len2 = 1 + (jax.random.randint(k3, (B2,), 0, S2)).astype(jnp.int32)
    mask2 = (jnp.arange(S2, dtype=jnp.int32)[None, :] < len2[:, None]).astype(jnp.float32)
    for name in ["mean", "max"]:
        _check(x2, mask2, name, atol=2e-3, rtol=2e-3)

    print("KERNEL_OK")
</pallas_src>

<mosaic_0001>
module attributes {stable_mosaic.version = 11 : i64} {
  func.func @_cls_kernel(%arg0: i32, %arg1: memref<2x8x32xf32, #tpu.memory_space<vmem>>, %arg2: memref<2x32xf32, #tpu.memory_space<vmem>>) attributes {dimension_semantics = [#tpu.dimension_semantics<arbitrary>], iteration_bounds = array<i64: 1>, scalar_prefetch = 0 : i64, scratch_operands = 0 : i64, tpu.core_type = #tpu.core_type<tc>, window_params = [{pipeline_mode = #tpu.pipeline_mode<synchronous>, transform_indices = @transform_0, window_bounds = array<i64: 2, 8, 32>}, {pipeline_mode = #tpu.pipeline_mode<synchronous>, transform_indices = @transform_1, window_bounds = array<i64: 2, 32>}]} {
    %c0 = arith.constant 0 : index
    %c0_0 = arith.constant 0 : index
    %c0_1 = arith.constant 0 : index
    %0 = vector.load %arg1[%c0, %c0_0, %c0_1] : memref<2x8x32xf32, #tpu.memory_space<vmem>>, vector<2x1x32xf32>
    %1 = vector.shape_cast %0 : vector<2x1x32xf32> to vector<2x32xf32>
    %c0_2 = arith.constant 0 : index
    %c0_3 = arith.constant 0 : index
    %2 = vector.load %arg2[%c0_2, %c0_3] : memref<2x32xf32, #tpu.memory_space<vmem>>, vector<2x32xf32>
    tpu.vector_store %arg2[%c0_2, %c0_3], %1 {strides = array<i32>} : memref<2x32xf32, #tpu.memory_space<vmem>>, vector<2x32xf32>,
    return
  }
  func.func @transform_0(%arg0: i32) -> (i32, i32, i32) {
    %c0_i32 = arith.constant 0 : i32
    %c0_i32_0 = arith.constant 0 : i32
    %c0_i32_1 = arith.constant 0 : i32
    %c0_i32_2 = arith.constant 0 : i32
    return %c0_i32, %c0_i32_0, %c0_i32_1 : i32, i32, i32
  }
  func.func @transform_1(%arg0: i32) -> (i32, i32) {
    %c0_i32 = arith.constant 0 : i32
    %c0_i32_0 = arith.constant 0 : i32
    %c0_i32_1 = arith.constant 0 : i32
    return %c0_i32, %c0_i32_0 : i32, i32
  }
}

</mosaic_0001>

<llo_original>
// kernel: pooling.1
$region0: #{pooling.1}
  #allocation0 [shape = 'u32[]', space=smem, size = 0x4, offset = 0x4, fixed_abs, tag = 'smem constant byte address 0x4 - core index']
  #allocation1 [shape = 'u32[144,128]{1,0:T(1,128)}', space=vmem, size = 0x12000, scoped, tag = 'internal scratch']
  %s0 = inlined_call_operand.hbm [shape: f32[2,8,32], index: 0, kind: input, shape index: {}]
  %s1 = inlined_call_operand.hbm [shape: f32[2,32], index: 1, kind: output, shape index: {}]
  %s2 = sld [smem:[#allocation0]]
  $region18: #{pooling.1} parent=0
    _
  %s4 = ssub.s32 1, %s2
  %s5 = scalar_select 0, %s4, %s2
  $region1: #{pooling.1} parent=0
    #allocation2 [shape = 'u8[8192]{0}', space=vmem, size = 0x2000, scoped, tag = 'input window, operand 0, single buffered']
    #allocation3 [shape = 's32[1]{0}', space=sflag, size = 0x4, scoped, tag = 'scoped memory for pooling.1']
    #allocation4 [shape = 's32[1]{0}', space=sflag, size = 0x4, scoped, tag = 'scoped memory for pooling.1']
    #allocation5 [shape = 'u8[1024]{0}', space=vmem, size = 0x400, scoped, tag = 'output window, operand 0, single buffered']
    %6 = vsyncpa [#allocation3], 0
    %7 = vsyncpa [#allocation4], 0
    // Predicated region
    $region2: #{pooling.1} parent=1 // pred_check
      _
    $region3: #{pooling.1} parent=1 // pred_check_branch
      %9 = sbr.rel (0) target = $region5
    $region4: #{pooling.1} parent=1 // pred_region
      %s11 = ssub.s32 256, 256
      %12 = vsyncadd [#allocation3], %s11
      %s13 = sshll.u32 [#allocation2], 4
      %s14 = int_to_ptr.vmem [resolvable:$true] %s13
      %19 = dma.hbm_to_vmem [thread:$0]  %s0, 256, %s14, [#allocation3], 128, 128, 8
    $region5: #{pooling.1} parent=1 // pred_fallthru
      _
    // Predicated region
    $region6: #{pooling.1} parent=1 // pred_check
      _
    $region7: #{pooling.1} parent=1 // pred_check_branch
      %21 = sbr.rel (0) target = $region9
    $region8: #{pooling.1} parent=1 // pred_region
      %22 = dma.done [#allocation3], 256
    $region9: #{pooling.1} parent=1 // pred_fallthru
      _
    %v23 = vld [vmem:[#allocation2] sm:$0x1]
    %v24 = vld [vmem:[#allocation2 + $0x8] sm:$0x1]
    %v27 = vrot.slane %v24, 7
    %vm28 = vcmask 1041409
    %v29 = vsel %vm28, %v27, %v23
    %vm31 = vcmask 254976
    %32 = vst.msk [vmem:[#allocation5] sm:$0x3] %vm31, %v29
    // Predicated region
    $region10: #{pooling.1} parent=1 // pred_check
      _
    $region11: #{pooling.1} parent=1 // pred_check_branch
      %34 = sbr.rel (0) target = $region13
    $region12: #{pooling.1} parent=1 // pred_region
      %s36 = ssub.s32 32, 32
      %37 = vsyncadd [#allocation4], %s36
      %s39 = sshll.u32 [#allocation5], 4
      %s40 = int_to_ptr.vmem [resolvable:$true] %s39
      %42 = dma.vmem_to_hbm [thread:$0]  %s40, 32, %s1, [#allocation4]
    $region13: #{pooling.1} parent=1 // pred_fallthru
      _
    // Predicated region
    $region14: #{pooling.1} parent=1 // pred_check
      _
    $region15: #{pooling.1} parent=1 // pred_check_branch
      %44 = sbr.rel (0) target = $region17
    $region16: #{pooling.1} parent=1 // pred_region
      %45 = dma.done [#allocation4], 32
    $region17: #{pooling.1} parent=1 // pred_fallthru
      _
    %46 = vsyncpa [#allocation3], 1
    %47 = vsyncpa [#allocation4], 1

</llo_original>
